<compile_context>
chip_gen: v7x
topology: tpu7x:2x2x1
jax: 0.10.0
libtpu: 0.0.40
codegen_flags: <defaults>
</compile_context>

<pallas_src>
import jax
import jax.numpy as jnp
from jax.experimental import pallas as pl
from jax.experimental.pallas import tpu as pltpu


def market_encoder_kernel(x_ref, wt_ref, b_ref, out_ref):
    # x_ref: (TB, M, H) -- batch tile, market items (reduced axis), hidden (lanes).
    M = x_ref.shape[1]
    # Mean over items BEFORE the matmul (linearity of the affine layer).
    # Accumulate in f32 regardless of input dtype.
    x_mean = jnp.sum(x_ref[...].astype(jnp.float32), axis=1) * (1.0 / M)  # (TB, H)
    # Weight arrives pre-transposed as (H, I): H contracts directly on the MXU,
    # no XLU transpose / relayout inside the kernel.
    y = jnp.dot(x_mean, wt_ref[...],
                preferred_element_type=jnp.float32)                       # (TB, I)
    out_ref[...] = (y + b_ref[...].astype(jnp.float32)).astype(out_ref.dtype)


def market_encoder(market, w, b, *, block_b=None):
    """market: (B, M, H), w: (I, H) (PyTorch Linear layout), b: (I,) -> (B, I)."""
    B, M, H = market.shape
    I = w.shape[0]

    # One-time XLA-side layout prep: transposed weight and 2-D bias.
    wt = jnp.asarray(w).T            # (H, I)
    b2 = jnp.asarray(b).reshape(1, I)

    if block_b is None:
        # Row-tile the batch axis so the streaming `market` input is
        # double-buffered by the BlockSpec pipeline.  Budget ~2 MiB per tile
        # (x2 for double buffering) -- safe under the 32 MiB scoped VMEM
        # default and under v7x's smaller physical VMEM.
        bytes_per_row = M * H * jnp.dtype(market.dtype).itemsize
        block_b = max(8, (2 * 1024 * 1024) // max(1, bytes_per_row))
        block_b = max(8, (block_b // 8) * 8)   # sublane-aligned tile
    if block_b >= B:
        block_b = B                            # single full-extent block (small B)

    grid = (pl.cdiv(B, block_b),)

    return pl.pallas_call(
        market_encoder_kernel,
        out_shape=jax.ShapeDtypeStruct((B, I), market.dtype),
        grid_spec=pltpu.PrefetchScalarGridSpec(
            num_scalar_prefetch=0,
            grid=grid,
            in_specs=[
                pl.BlockSpec((block_b, M, H), lambda i: (i, 0, 0)),  # streamed
                pl.BlockSpec((H, I), lambda i: (0, 0)),              # resident
                pl.BlockSpec((1, I), lambda i: (0, 0)),              # resident
            ],
            out_specs=pl.BlockSpec((block_b, I), lambda i: (i, 0)),
        ),
        # Batch/row axis is embarrassingly parallel: shard across TensorCores
        # (2 on v7x) and let the runtime pipeline tiles.
        compiler_params=pltpu.CompilerParams(
            dimension_semantics=("parallel",)),
    )(market, wt, b2)


if __name__ == "__main__":
    # Small shapes consistent with the module: hidden_size=32 input features,
    # input_size=16 output features, batch=2, 8 market items.
    B, M = 2, 8
    hidden_size, input_size = 32, 16

    key = jax.random.PRNGKey(0)
    k_m, k_w, k_b = jax.random.split(key, 3)

    market = jax.random.normal(k_m, (B, M, hidden_size), dtype=jnp.float32)

    # Deterministic param init mimicking torch.nn.Linear default:
    # U(-1/sqrt(in_features), 1/sqrt(in_features))
    bound = 1.0 / jnp.sqrt(jnp.float32(hidden_size))
    w = jax.random.uniform(k_w, (input_size, hidden_size),
                           minval=-bound, maxval=bound, dtype=jnp.float32)
    b = jax.random.uniform(k_b, (input_size,),
                           minval=-bound, maxval=bound, dtype=jnp.float32)

    out = market_encoder(market, w, b)
    out = jax.block_until_ready(out)

    # Pure-JAX reference for correctness (matmul-then-mean, as in the module).
    ref = jnp.mean(jnp.einsum("bmh,ih->bmi", market, w) + b, axis=-2)
    assert out.shape == (B, input_size)
    assert jnp.allclose(out, ref, atol=1e-5, rtol=1e-5)

    print("KERNEL_OK")
</pallas_src>

<mosaic_0001>
module attributes {stable_mosaic.version = 11 : i64} {
  func.func @market_encoder_kernel(%arg0: i32, %arg1: memref<2x8x32xf32, #tpu.memory_space<vmem>>, %arg2: memref<32x16xf32, #tpu.memory_space<vmem>>, %arg3: memref<1x16xf32, #tpu.memory_space<vmem>>, %arg4: memref<2x16xf32, #tpu.memory_space<vmem>>) attributes {dimension_semantics = [#tpu.dimension_semantics<parallel>], iteration_bounds = array<i64: 1>, scalar_prefetch = 0 : i64, scratch_operands = 0 : i64, tpu.core_type = #tpu.core_type<tc>, window_params = [{transform_indices = @transform_0, window_bounds = array<i64: 2, 8, 32>}, {pipeline_mode = #tpu.pipeline_mode<synchronous>, transform_indices = @transform_1, window_bounds = array<i64: 32, 16>}, {pipeline_mode = #tpu.pipeline_mode<synchronous>, transform_indices = @transform_2, window_bounds = array<i64: 1, 16>}, {transform_indices = @transform_3, window_bounds = array<i64: 2, 16>}]} {
    %c0 = arith.constant 0 : index
    %c0_0 = arith.constant 0 : index
    %c0_1 = arith.constant 0 : index
    %0 = vector.load %arg1[%c0, %c0_0, %c0_1] : memref<2x8x32xf32, #tpu.memory_space<vmem>>, vector<2x8x32xf32>
    %cst = arith.constant dense<0.000000e+00> : vector<2x32xf32>
    %1 = vector.multi_reduction <add>, %0, %cst [1] : vector<2x8x32xf32> to vector<2x32xf32>
    %cst_2 = arith.constant 1.250000e-01 : f32
    %2 = vector.broadcast %cst_2 : f32 to vector<2x32xf32>
    %3 = arith.mulf %1, %2 : vector<2x32xf32>
    %c0_3 = arith.constant 0 : index
    %c0_4 = arith.constant 0 : index
    %4 = vector.load %arg2[%c0_3, %c0_4] : memref<32x16xf32, #tpu.memory_space<vmem>>, vector<32x16xf32>
    %cst_5 = arith.constant dense<0.000000e+00> : vector<2x16xf32>
    %5 = tpu.matmul %3, %4, %cst_5 {dimension_numbers = #tpu.dot_dimension_numbers<[1], [0], [0], [1], [0, 0, 1, 1], [], []>} : vector<2x32xf32>, vector<32x16xf32>, vector<2x16xf32> -> vector<2x16xf32>
    %c0_6 = arith.constant 0 : index
    %c0_7 = arith.constant 0 : index
    %6 = vector.load %arg3[%c0_6, %c0_7] : memref<1x16xf32, #tpu.memory_space<vmem>>, vector<1x16xf32>
    %7 = vector.broadcast %6 : vector<1x16xf32> to vector<2x16xf32>
    %8 = arith.addf %5, %7 : vector<2x16xf32>
    %c0_8 = arith.constant 0 : index
    %c0_9 = arith.constant 0 : index
    %9 = vector.load %arg4[%c0_8, %c0_9] : memref<2x16xf32, #tpu.memory_space<vmem>>, vector<2x16xf32>
    tpu.vector_store %arg4[%c0_8, %c0_9], %8 {strides = array<i32>} : memref<2x16xf32, #tpu.memory_space<vmem>>, vector<2x16xf32>,
    return
  }
  func.func @transform_0(%arg0: i32) -> (i32, i32, i32) {
    %c0_i32 = arith.constant 0 : i32
    %c0_i32_0 = arith.constant 0 : i32
    %c0_i32_1 = arith.constant 0 : i32
    return %arg0, %c0_i32, %c0_i32_0 : i32, i32, i32
  }
  func.func @transform_1(%arg0: i32) -> (i32, i32) {
    %c0_i32 = arith.constant 0 : i32
    %c0_i32_0 = arith.constant 0 : i32
    %c0_i32_1 = arith.constant 0 : i32
    return %c0_i32, %c0_i32_0 : i32, i32
  }
  func.func @transform_2(%arg0: i32) -> (i32, i32) {
    %c0_i32 = arith.constant 0 : i32
    %c0_i32_0 = arith.constant 0 : i32
    %c0_i32_1 = arith.constant 0 : i32
    return %c0_i32, %c0_i32_0 : i32, i32
  }
  func.func @transform_3(%arg0: i32) -> (i32, i32) {
    %c0_i32 = arith.constant 0 : i32
    %c0_i32_0 = arith.constant 0 : i32
    return %arg0, %c0_i32 : i32, i32
  }
}

</mosaic_0001>

<llo_original>
// kernel: tpu_custom_call.1
$region0: #{tpu_custom_call.1}
  #allocation0 [shape = 'u32[]', space=smem, size = 0x4, offset = 0x4, fixed_abs, tag = 'smem constant byte address 0x4 - core index']
  #allocation1 [shape = 'u32[144,128]{1,0:T(1,128)}', space=vmem, size = 0x12000, scoped, tag = 'internal scratch']
  %s0 = inlined_call_operand.vmem [shape: f32[2,8,32], index: 0, kind: input, shape index: {}]
  %s1 = inlined_call_operand.vmem [shape: f32[32,16], index: 1, kind: input, shape index: {}]
  %s2 = inlined_call_operand.vmem [shape: f32[1,16], index: 2, kind: input, shape index: {}]
  %s3 = inlined_call_operand.hbm [shape: f32[2,16], index: 3, kind: output, shape index: {}]
  %s4 = sld [smem:[#allocation0]]
  $region22: #{tpu_custom_call.1} parent=0
    _
  %s6 = ssub.s32 1, %s4
  %s7 = scalar_select 0, %s6, %s4
  $region1: #{tpu_custom_call.1} parent=0
    #allocation2 [shape = 'u8[1024]{0}', space=vmem, size = 0x400, scoped, tag = 'output window, operand 0, single buffered']
    #allocation3 [shape = 's32[1]{0}', space=sflag, size = 0x4, scoped, tag = 'scoped memory for tpu_custom_call.1']
    %8 = vsyncpa [#allocation3], 0
    // Predicated region
    $region2: #{tpu_custom_call.1} parent=1 // pred_check
      _
    $region3: #{tpu_custom_call.1} parent=1 // pred_check_branch
      %10 = sbr.rel (0) target = $region5
    $region4: #{tpu_custom_call.1} parent=1 // pred_region
      _
    $region5: #{tpu_custom_call.1} parent=1 // pred_fallthru
      _
    // Predicated region
    $region6: #{tpu_custom_call.1} parent=1 // pred_check
      _
    $region7: #{tpu_custom_call.1} parent=1 // pred_check_branch
      %12 = sbr.rel (0) target = $region9
    $region8: #{tpu_custom_call.1} parent=1 // pred_region
      _
    $region9: #{tpu_custom_call.1} parent=1 // pred_fallthru
      _
    // Predicated region
    $region10: #{tpu_custom_call.1} parent=1 // pred_check
      _
    $region11: #{tpu_custom_call.1} parent=1 // pred_check_branch
      %14 = sbr.rel (0) target = $region13
    $region12: #{tpu_custom_call.1} parent=1 // pred_region
      _
    $region13: #{tpu_custom_call.1} parent=1 // pred_fallthru
      _
    %v15 = vld [vmem:[%s0] sm:$0xff]
    %v16 = vld [vmem:[%s0 + $0x8] sm:$0xff]
    %vm17 = vcmask 261120
    %v18 = vsel %vm17, %v15, 0.0
    %v19 = vrot.slane %v18, 4
    %v20 = vadd.f32 %v18, %v19
    %v21 = vrot.slane %v20, 2
    %v22 = vadd.f32 %v20, %v21
    %v23 = vrot.slane %v22, 1
    %v24 = vadd.f32 %v22, %v23
    %v25 = vsel %vm17, %v16, 0.0
    %v26 = vrot.slane %v25, 4
    %v27 = vadd.f32 %v25, %v26
    %v28 = vrot.slane %v27, 2
    %v29 = vadd.f32 %v27, %v28
    %v30 = vrot.slane %v29, 1
    %v31 = vadd.f32 %v29, %v30
    %v32 = vmul.f32 %v24, 0.125
    %v33 = vmul.f32 %v31, 0.125
    %v34 = vld [vmem:[%s1] sm:$0xff]
    %v35 = vld [vmem:[%s1 + $0x8] sm:$0xff]
    %v36 = vld [vmem:[%s1 + $0x10] sm:$0xff]
    %v37 = vld [vmem:[%s1 + $0x18] sm:$0xff]
    %v38 = vld [vmem:[%s2] sm:$0x1]
    %v40 = vlaneseq
    %v41 = vshrl.u32 %v40, 7
    %v42 = vsub.s32 0, %v41
    %v43 = vrot.slane %v38, %v42
    %vm47 = vcmask 1041409
    %v48 = vsel %vm47, %v33, %v32
    %v49 = vsel %vm17, %v48, 0
    %51 = vmatprep.subr.mxu0 0.0
    %52 = vmatpush1.msra.mxu0 %v34
    %53 = vmatprep.subr.mxu0 0.0
    %54 = vmatpush1.msra.mxu0 %v35
    %55 = vmatprep.subr.mxu0 0.0
    %56 = vmatpush1.msra.mxu0 %v36
    %57 = vmatprep.subr.mxu0 0.0
    %58 = vmatpush1.msra.mxu0 %v37
    %59 = vmatprep.subr.mxu0 0.0
    %60 = vmatpush1.msra.mxu0 0.0
    %61 = vmatprep.subr.mxu0 0.0
    %62 = vmatpush1.msra.mxu0 0.0
    %63 = vmatprep.subr.mxu0 0.0
    %64 = vmatpush1.msra.mxu0 0.0
    %65 = vmatprep.subr.mxu0 0.0
    %66 = vmatpush1.msra.mxu0 0.0
    %67 = vmatprep.subr.mxu0 0.0
    %68 = vmatpush1.msra.mxu0 0.0
    %69 = vmatprep.subr.mxu0 0.0
    %70 = vmatpush1.msra.mxu0 0.0
    %71 = vmatprep.subr.mxu0 0.0
    %72 = vmatpush1.msra.mxu0 0.0
    %73 = vmatprep.subr.mxu0 0.0
    %74 = vmatpush1.msra.mxu0 0.0
    %75 = vmatprep.subr.mxu0 0.0
    %76 = vmatpush1.msra.mxu0 0.0
    %77 = vmatprep.subr.mxu0 0.0
    %78 = vmatpush1.msra.mxu0 0.0
    %79 = vmatprep.subr.mxu0 0.0
    %80 = vmatpush1.msra.mxu0 0.0
    %81 = vmatprep.subr.mxu0 0.0
    %82 = vmatpush1.msra.mxu0 0.0
    %83 = vmatprep.subr.mxu0 0.0
    %84 = vmatpush1.msra.mxu0 0.0
    %85 = vmatprep.subr.mxu0 0.0
    %86 = vmatpush1.msra.mxu0 0.0
    %87 = vmatprep.subr.mxu0 0.0
    %88 = vmatpush1.msra.mxu0 0.0
    %89 = vmatprep.subr.mxu0 0.0
    %90 = vmatpush1.msra.mxu0 0.0
    %91 = vmatprep.subr.mxu0 0.0
    %92 = vmatpush1.msra.mxu0 0.0
    %93 = vmatprep.subr.mxu0 0.0
    %94 = vmatpush1.msra.mxu0 0.0
    %95 = vmatprep.subr.mxu0 0.0
    %96 = vmatpush1.msra.mxu0 0.0
    %97 = vmatprep.subr.mxu0 0.0
    %98 = vmatpush1.msra.mxu0 0.0
    %99 = vmatprep.subr.mxu0 0.0
    %100 = vmatpush1.msra.mxu0 0.0
    %101 = vmatprep.subr.mxu0 0.0
    %102 = vmatpush1.msra.mxu0 0.0
    %103 = vmatprep.subr.mxu0 0.0
    %104 = vmatpush1.msra.mxu0 0.0
    %105 = vmatprep.subr.mxu0 0.0
    %106 = vmatpush1.msra.mxu0 0.0
    %107 = vmatprep.subr.mxu0 0.0
    %108 = vmatpush1.msra.mxu0 0.0
    %109 = vmatprep.subr.mxu0 0.0
    %110 = vmatpush1.msra.mxu0 0.0
    %111 = vmatprep.subr.mxu0 0.0
    %112 = vmatpush1.msra.mxu0 0.0
    %113 = vmatprep.subr.mxu0 0.0
    %114 = vmatpush1.msra.mxu0 0.0
    %115 = vmatprep.mubr.f32.mxu0 0.0
    %116 = vmatmul.mubr.f32.gmra.mrb[0].mxu0 %v49
    %v117 = vpop.f32.mrb[0].mxu0
    %v118 = vadd.f32 %v43, %v117
    %v119 = vpop.f32.mrb[0].mxu0
    %120 = vdwg.mxu0
    %vm121 = vcmask 123904
    %122 = vst.msk [vmem:[#allocation2] sm:$0x3] %vm121, %v118
    // Predicated region
    $region14: #{tpu_custom_call.1} parent=1 // pred_check
      _
    $region15: #{tpu_custom_call.1} parent=1 // pred_check_branch
      %124 = sbr.rel (0) target = $region17
    $region16: #{tpu_custom_call.1} parent=1 // pred_region
      %s126 = ssub.s32 32, 32
      %127 = vsyncadd [#allocation3], %s126
      %s129 = sshll.u32 [#allocation2], 4
      %s130 = int_to_ptr.vmem [resolvable:$true] %s129
      %132 = dma.vmem_to_hbm [thread:$0]  %s130, 32, %s3, [#allocation3]
    $region17: #{tpu_custom_call.1} parent=1 // pred_fallthru
      _
    // Predicated region
    $region18: #{tpu_custom_call.1} parent=1 // pred_check
      _
    $region19: #{tpu_custom_call.1} parent=1 // pred_check_branch
      %134 = sbr.rel (0) target = $region21
    $region20: #{tpu_custom_call.1} parent=1 // pred_region
      %135 = dma.done [#allocation3], 32
    $region21: #{tpu_custom_call.1} parent=1 // pred_fallthru
      _
    %136 = vsyncpa [#allocation3], 1

</llo_original>
